<compile_context>
chip_gen: v6e
topology: v6e:2x2x1
jax: 0.10.0
libtpu: 0.0.40
codegen_flags: <defaults>
</compile_context>

<pallas_src>
import jax
import jax.numpy as jnp
from jax.experimental import pallas as pl
from jax.experimental.pallas import tpu as pltpu

_LANE = 128
_SUBLANE = 8
# Byte budget for ALL double-buffered input blocks of one pallas_call.
# Six f32 inputs -> tile_rows = 4096 (2 MiB per input block).
_INPUT_VMEM_BUDGET = 24 * 1024 * 1024
_VMEM_SLACK = 8 * 1024 * 1024


def _num_tensorcores():
    """TensorCores per chip (2 on v7x, 1 on v5e/v6e); safe default is 1."""
    try:
        info = pltpu.get_tpu_info()
    except Exception:
        return 1
    for name in ("num_cores", "core_count", "tensorcore_count",
                 "num_tensorcores", "num_tensor_cores"):
        v = getattr(info, name, None)
        if isinstance(v, int) and 1 <= v <= 8:
            return v
    return 1


def _to_slab(x):
    """Flatten row-major into a lane-dense (rows, 128) slab with rows % 8 == 0.

    When numel % 1024 == 0 (typical NCHW frames) this is a pure reshape;
    otherwise the ragged tail pays one small zero-padded copy.  Both members
    of a pair receive identical zero padding, so padded positions contribute
    |0 - 0| = 0 and never need masking.
    """
    flat = jnp.ravel(x)
    n = flat.shape[0]
    chunk = _SUBLANE * _LANE
    rem = n % chunk
    if rem:
        flat = jnp.pad(flat, (0, chunk - rem))
    return flat.reshape(-1, _LANE)


def _make_kernel(rows, tile_rows, steps, weights, needs_edge):
    n_pairs = len(weights)
    folds = tile_rows // _SUBLANE

    def contrib(pair_refs, blk, masked):
        d = None
        for (a_ref, b_ref), w in zip(pair_refs, weights):
            t = jnp.abs(a_ref[...].astype(jnp.float32)
                        - b_ref[...].astype(jnp.float32)) * jnp.float32(w)
            d = t if d is None else d + t
        if masked:
            row_ids = blk * tile_rows + jax.lax.broadcasted_iota(
                jnp.int32, (tile_rows, _LANE), 0)
            d = jnp.where(row_ids < rows, d, 0.0)
        # Sublane-axis fold: (tile_rows, 128) -> (8, 128) with pure VPU adds.
        return d.reshape(folds, _SUBLANE, _LANE).sum(axis=0)

    def kernel(*refs):
        in_refs = refs[:2 * n_pairs]
        out_ref = refs[2 * n_pairs]
        acc_ref = refs[2 * n_pairs + 1]
        pair_refs = [(in_refs[2 * p], in_refs[2 * p + 1])
                     for p in range(n_pairs)]

        i = pl.program_id(0)
        k = pl.program_id(1)
        blk = i * steps + k

        @pl.when(k == 0)
        def _init():
            acc_ref[...] = jnp.zeros_like(acc_ref)

        if needs_edge:
            is_interior = (blk + 1) * tile_rows <= rows

            @pl.when(is_interior)
            def _interior():
                acc_ref[...] += contrib(pair_refs, blk, False)

            @pl.when(jnp.logical_not(is_interior))
            def _edge():
                # Covers both the ragged last block and any phantom block
                # (clamped index_map); phantom rows mask to exactly zero.
                acc_ref[...] += contrib(pair_refs, blk, True)
        else:
            acc_ref[...] += contrib(pair_refs, blk, False)

        @pl.when(k == steps - 1)
        def _finalize():
            out_ref[...] = acc_ref[...]

    return kernel


def _weighted_l1_sum(pairs, weights):
    """sum_i weights[i] * sum(|a_i - b_i|) via one fused Pallas reduction."""
    slabs = []
    for a, b in pairs:
        assert a.size == b.size, (a.shape, b.shape)
        slabs.append((_to_slab(a), _to_slab(b)))
    rows = slabs[0][0].shape[0]
    assert all(sa.shape[0] == rows for sa, _ in slabs)

    itemsize_sum = sum(sa.dtype.itemsize + sb.dtype.itemsize
                       for sa, sb in slabs)
    # Size the tile by bytes so 16-bit inputs get proportionally more rows.
    budget_rows = _INPUT_VMEM_BUDGET // (2 * _LANE * itemsize_sum)
    budget_rows = max(_SUBLANE, (budget_rows // 32) * 32)
    tile_rows = min(budget_rows, rows)

    num_blocks = pl.cdiv(rows, tile_rows)
    n_split = max(1, min(_num_tensorcores(), num_blocks))
    steps = pl.cdiv(num_blocks, n_split)
    has_phantom = n_split * steps != num_blocks
    needs_edge = has_phantom or (rows % tile_rows != 0)

    if has_phantom:
        # Clamp keeps the phantom step's DMA in bounds (and, matching the
        # previous step's block, it is not re-fetched); its contribution is
        # masked to zero in-kernel.
        def in_map(i, k):
            return (jnp.minimum(i * steps + k, num_blocks - 1), 0)
    else:
        def in_map(i, k):
            return (i * steps + k, 0)

    kernel = _make_kernel(rows, tile_rows, steps, weights, needs_edge)

    flat_inputs = [s for pair in slabs for s in pair]
    in_specs = [pl.BlockSpec((tile_rows, _LANE), in_map)
                for _ in flat_inputs]

    bytes_accessed = sum(int(s.size) * s.dtype.itemsize for s in flat_inputs)
    cost = pl.CostEstimate(
        flops=4 * sum(int(sa.size) for sa, _ in slabs),
        transcendentals=0,
        bytes_accessed=bytes_accessed)

    vmem_limit = int(2 * tile_rows * _LANE * itemsize_sum + _VMEM_SLACK)

    out = pl.pallas_call(
        kernel,
        out_shape=jax.ShapeDtypeStruct((n_split * _SUBLANE, _LANE),
                                       jnp.float32),
        grid=(n_split, steps),
        in_specs=in_specs,
        out_specs=pl.BlockSpec((_SUBLANE, _LANE), lambda i, k: (i, 0)),
        scratch_shapes=[pltpu.VMEM((_SUBLANE, _LANE), jnp.float32)],
        compiler_params=pltpu.CompilerParams(
            dimension_semantics=("parallel", "arbitrary"),
            vmem_limit_bytes=vmem_limit),
        cost_estimate=cost,
    )(*flat_inputs)

    return jnp.sum(out)


def mctf_loss(lq_first, lq_second, warp_first, warp_second, gt, enhanced):
    pairs = [(lq_first, warp_first), (lq_second, warp_second),
             (gt, enhanced)]
    # Per-element weights fold the 1/N of each mean and the 0.5 on the
    # ground-truth term, so the kernel output sums directly to the loss.
    weights = [1.0 / lq_first.size, 1.0 / lq_second.size, 0.5 / gt.size]

    def slab_rows(x):
        return -(-x.size // (_SUBLANE * _LANE))

    rows = [slab_rows(a) for a, _ in pairs]
    if rows[0] == rows[1] == rows[2]:
        # Common case (all frames share a resolution): one fused kernel.
        return _weighted_l1_sum(pairs, weights)
    # Pairs with different slab sizes cannot share one grid; reduce each
    # separately (rare for MCTF).
    total = None
    for pair, w in zip(pairs, weights):
        s = _weighted_l1_sum([pair], [w])
        total = s if total is None else total + s
    return total


def _reference(lq1, lq2, w1, w2, gt, en):
    l1 = lambda a, b: jnp.mean(jnp.abs(a.astype(jnp.float32)
                                       - b.astype(jnp.float32)))
    return l1(lq1, w1) + l1(lq2, w2) + 0.5 * l1(gt, en)


if __name__ == "__main__":
    key = jax.random.PRNGKey(0)
    ks = jax.random.split(key, 6)
    shape = (2, 4, 16, 16)  # NCHW, small synthetic frames

    lq_first = jax.random.normal(ks[0], shape, jnp.float32)
    lq_second = jax.random.normal(ks[1], shape, jnp.float32)
    warp_first = jax.random.normal(ks[2], shape, jnp.float32)
    warp_second = jax.random.normal(ks[3], shape, jnp.float32)
    gt_data = jax.random.normal(ks[4], shape, jnp.float32)
    enhanced_data = jax.random.normal(ks[5], shape, jnp.float32)

    loss = jax.jit(mctf_loss)(lq_first, lq_second, warp_first, warp_second,
                              gt_data, enhanced_data)
    loss = jax.block_until_ready(loss)

    ref = _reference(lq_first, lq_second, warp_first, warp_second,
                     gt_data, enhanced_data)
    assert jnp.allclose(loss, ref, rtol=1e-5, atol=1e-5), (loss, ref)

    print("KERNEL_OK")
</pallas_src>

<mosaic_0001>
module attributes {stable_mosaic.version = 11 : i64} {
  func.func @kernel(%arg0: i32, %arg1: i32, %arg2: memref<16x128xf32, #tpu.memory_space<vmem>>, %arg3: memref<16x128xf32, #tpu.memory_space<vmem>>, %arg4: memref<16x128xf32, #tpu.memory_space<vmem>>, %arg5: memref<16x128xf32, #tpu.memory_space<vmem>>, %arg6: memref<16x128xf32, #tpu.memory_space<vmem>>, %arg7: memref<16x128xf32, #tpu.memory_space<vmem>>, %arg8: memref<8x128xf32, #tpu.memory_space<vmem>>, %arg9: memref<8x128xf32, #tpu.memory_space<vmem>>) attributes {dimension_semantics = [#tpu.dimension_semantics<parallel>, #tpu.dimension_semantics<arbitrary>], iteration_bounds = array<i64: 1, 1>, scalar_prefetch = 0 : i64, scratch_operands = 1 : i64, tpu.core_type = #tpu.core_type<tc>, window_params = [{transform_indices = @transform_0, window_bounds = array<i64: 16, 128>}, {transform_indices = @transform_1, window_bounds = array<i64: 16, 128>}, {transform_indices = @transform_2, window_bounds = array<i64: 16, 128>}, {transform_indices = @transform_3, window_bounds = array<i64: 16, 128>}, {transform_indices = @transform_4, window_bounds = array<i64: 16, 128>}, {transform_indices = @transform_5, window_bounds = array<i64: 16, 128>}, {transform_indices = @transform_6, window_bounds = array<i64: 8, 128>}]} {
    %c0_i32 = arith.constant 0 : i32
    %0 = arith.cmpi eq, %arg1, %c0_i32 : i32
    %1 = arith.extui %0 : i1 to i32
    %c0_i32_0 = arith.constant 0 : i32
    %2 = arith.cmpi ne, %1, %c0_i32_0 : i32
    scf.if %2 {
      %cst_21 = arith.constant 0.000000e+00 : f32
      %31 = vector.broadcast %cst_21 : f32 to vector<8x128xf32>
      %c0_22 = arith.constant 0 : index
      %c0_23 = arith.constant 0 : index
      %32 = vector.load %arg9[%c0_22, %c0_23] : memref<8x128xf32, #tpu.memory_space<vmem>>, vector<8x128xf32>
      tpu.vector_store %arg9[%c0_22, %c0_23], %31 {strides = array<i32>} : memref<8x128xf32, #tpu.memory_space<vmem>>, vector<8x128xf32>,
    } else {
    }
    %c0 = arith.constant 0 : index
    %c0_1 = arith.constant 0 : index
    %3 = vector.load %arg9[%c0, %c0_1] : memref<8x128xf32, #tpu.memory_space<vmem>>, vector<8x128xf32>
    %c0_2 = arith.constant 0 : index
    %c0_3 = arith.constant 0 : index
    %4 = vector.load %arg2[%c0_2, %c0_3] : memref<16x128xf32, #tpu.memory_space<vmem>>, vector<16x128xf32>
    %c0_4 = arith.constant 0 : index
    %c0_5 = arith.constant 0 : index
    %5 = vector.load %arg3[%c0_4, %c0_5] : memref<16x128xf32, #tpu.memory_space<vmem>>, vector<16x128xf32>
    %6 = arith.subf %4, %5 : vector<16x128xf32>
    %7 = math.absf %6 : vector<16x128xf32>
    %cst = arith.constant 4.8828125E-4 : f32
    %8 = vector.broadcast %cst : f32 to vector<16x128xf32>
    %9 = arith.mulf %7, %8 : vector<16x128xf32>
    %c0_6 = arith.constant 0 : index
    %c0_7 = arith.constant 0 : index
    %10 = vector.load %arg4[%c0_6, %c0_7] : memref<16x128xf32, #tpu.memory_space<vmem>>, vector<16x128xf32>
    %c0_8 = arith.constant 0 : index
    %c0_9 = arith.constant 0 : index
    %11 = vector.load %arg5[%c0_8, %c0_9] : memref<16x128xf32, #tpu.memory_space<vmem>>, vector<16x128xf32>
    %12 = arith.subf %10, %11 : vector<16x128xf32>
    %13 = math.absf %12 : vector<16x128xf32>
    %cst_10 = arith.constant 4.8828125E-4 : f32
    %14 = vector.broadcast %cst_10 : f32 to vector<16x128xf32>
    %15 = arith.mulf %13, %14 : vector<16x128xf32>
    %16 = arith.addf %9, %15 : vector<16x128xf32>
    %c0_11 = arith.constant 0 : index
    %c0_12 = arith.constant 0 : index
    %17 = vector.load %arg6[%c0_11, %c0_12] : memref<16x128xf32, #tpu.memory_space<vmem>>, vector<16x128xf32>
    %c0_13 = arith.constant 0 : index
    %c0_14 = arith.constant 0 : index
    %18 = vector.load %arg7[%c0_13, %c0_14] : memref<16x128xf32, #tpu.memory_space<vmem>>, vector<16x128xf32>
    %19 = arith.subf %17, %18 : vector<16x128xf32>
    %20 = math.absf %19 : vector<16x128xf32>
    %cst_15 = arith.constant 2.44140625E-4 : f32
    %21 = vector.broadcast %cst_15 : f32 to vector<16x128xf32>
    %22 = arith.mulf %20, %21 : vector<16x128xf32>
    %23 = arith.addf %16, %22 : vector<16x128xf32>
    %24 = vector.shape_cast %23 : vector<16x128xf32> to vector<2x8x128xf32>
    %cst_16 = arith.constant dense<0.000000e+00> : vector<8x128xf32>
    %25 = vector.multi_reduction <add>, %24, %cst_16 [0] : vector<2x8x128xf32> to vector<8x128xf32>
    %26 = arith.addf %3, %25 : vector<8x128xf32>
    %c0_17 = arith.constant 0 : index
    %c0_18 = arith.constant 0 : index
    %27 = vector.load %arg9[%c0_17, %c0_18] : memref<8x128xf32, #tpu.memory_space<vmem>>, vector<8x128xf32>
    tpu.vector_store %arg9[%c0_17, %c0_18], %26 {strides = array<i32>} : memref<8x128xf32, #tpu.memory_space<vmem>>, vector<8x128xf32>,
    %c0_i32_19 = arith.constant 0 : i32
    %28 = arith.cmpi eq, %arg1, %c0_i32_19 : i32
    %29 = arith.extui %28 : i1 to i32
    %c0_i32_20 = arith.constant 0 : i32
    %30 = arith.cmpi ne, %29, %c0_i32_20 : i32
    scf.if %30 {
      %c0_21 = arith.constant 0 : index
      %c0_22 = arith.constant 0 : index
      %31 = vector.load %arg9[%c0_21, %c0_22] : memref<8x128xf32, #tpu.memory_space<vmem>>, vector<8x128xf32>
      %c0_23 = arith.constant 0 : index
      %c0_24 = arith.constant 0 : index
      %32 = vector.load %arg8[%c0_23, %c0_24] : memref<8x128xf32, #tpu.memory_space<vmem>>, vector<8x128xf32>
      tpu.vector_store %arg8[%c0_23, %c0_24], %31 {strides = array<i32>} : memref<8x128xf32, #tpu.memory_space<vmem>>, vector<8x128xf32>,
    } else {
    }
    return
  }
  func.func @transform_0(%arg0: i32, %arg1: i32) -> (i32, i32) {
    %c1_i32 = arith.constant 1 : i32
    %0 = arith.muli %arg0, %c1_i32 : i32
    %1 = arith.addi %0, %arg1 : i32
    %c0_i32 = arith.constant 0 : i32
    %c0_i32_0 = arith.constant 0 : i32
    return %1, %c0_i32 : i32, i32
  }
  func.func @transform_1(%arg0: i32, %arg1: i32) -> (i32, i32) {
    %c1_i32 = arith.constant 1 : i32
    %0 = arith.muli %arg0, %c1_i32 : i32
    %1 = arith.addi %0, %arg1 : i32
    %c0_i32 = arith.constant 0 : i32
    %c0_i32_0 = arith.constant 0 : i32
    return %1, %c0_i32 : i32, i32
  }
  func.func @transform_2(%arg0: i32, %arg1: i32) -> (i32, i32) {
    %c1_i32 = arith.constant 1 : i32
    %0 = arith.muli %arg0, %c1_i32 : i32
    %1 = arith.addi %0, %arg1 : i32
    %c0_i32 = arith.constant 0 : i32
    %c0_i32_0 = arith.constant 0 : i32
    return %1, %c0_i32 : i32, i32
  }
  func.func @transform_3(%arg0: i32, %arg1: i32) -> (i32, i32) {
    %c1_i32 = arith.constant 1 : i32
    %0 = arith.muli %arg0, %c1_i32 : i32
    %1 = arith.addi %0, %arg1 : i32
    %c0_i32 = arith.constant 0 : i32
    %c0_i32_0 = arith.constant 0 : i32
    return %1, %c0_i32 : i32, i32
  }
  func.func @transform_4(%arg0: i32, %arg1: i32) -> (i32, i32) {
    %c1_i32 = arith.constant 1 : i32
    %0 = arith.muli %arg0, %c1_i32 : i32
    %1 = arith.addi %0, %arg1 : i32
    %c0_i32 = arith.constant 0 : i32
    %c0_i32_0 = arith.constant 0 : i32
    return %1, %c0_i32 : i32, i32
  }
  func.func @transform_5(%arg0: i32, %arg1: i32) -> (i32, i32) {
    %c1_i32 = arith.constant 1 : i32
    %0 = arith.muli %arg0, %c1_i32 : i32
    %1 = arith.addi %0, %arg1 : i32
    %c0_i32 = arith.constant 0 : i32
    %c0_i32_0 = arith.constant 0 : i32
    return %1, %c0_i32 : i32, i32
  }
  func.func @transform_6(%arg0: i32, %arg1: i32) -> (i32, i32) {
    %c0_i32 = arith.constant 0 : i32
    %c0_i32_0 = arith.constant 0 : i32
    return %arg0, %c0_i32 : i32, i32
  }
}

</mosaic_0001>

<llo_original>
// kernel: mctf_loss.1
$region0: #{mctf_loss.1}
  #allocation0 [shape = 'u32[]', space=smem, size = 0x4, offset = 0x4, fixed_abs, tag = 'smem constant byte address 0x4 - core index']
  #allocation1 [shape = 'u32[144,128]{1,0:T(1,128)}', space=vmem, size = 0x12000, scoped, tag = 'internal scratch']
  #allocation2 [shape = 'f32[8,128]{1,0:T(8,128)}', space=vmem, size = 0x1000, scoped, tag = 'scratch operand']
  %s0 = inlined_call_operand.vmem [shape: f32[16,128], index: 0, kind: input, shape index: {}]
  %s1 = inlined_call_operand.vmem [shape: f32[16,128], index: 1, kind: input, shape index: {}]
  %s2 = inlined_call_operand.vmem [shape: f32[16,128], index: 2, kind: input, shape index: {}]
  %s3 = inlined_call_operand.vmem [shape: f32[16,128], index: 3, kind: input, shape index: {}]
  %s4 = inlined_call_operand.vmem [shape: f32[16,128], index: 4, kind: input, shape index: {}]
  %s5 = inlined_call_operand.vmem [shape: f32[16,128], index: 5, kind: input, shape index: {}]
  %s6 = inlined_call_operand.vmem [shape: f32[8,128], index: 6, kind: output, shape index: {}]
  %s7 = sld [smem:[#allocation0]]
  $region42: #{mctf_loss.1} parent=0
    _
  %s9 = ssub.s32 1, %s7
  %s10 = scalar_select 0, %s9, %s7
  // Predicated region
  $region2: #{mctf_loss.1} parent=0 // pred_check
    _
  $region3: #{mctf_loss.1} parent=0 // pred_check_branch
    %12 = sbr.rel (0) target = $region5
  $region4: #{mctf_loss.1} parent=0 // pred_region
    %s13 = sadd.s32 0, 0
    %s14 = smul.u32 2, %s13
    %p15 = scmp.lt.s32.totalorder %s14, 1
    %s16 = scalar_select %p15, %s14, 1
    %s17 = smul.addr %s16, 8
    %s18 = scalar_lea.vmem %s0, %s17
    %s19 = sadd.s32 0, 0
    %s20 = smul.u32 2, %s19
  $region5: #{mctf_loss.1} parent=0 // pred_fallthru
    _
  // Predicated region
  $region6: #{mctf_loss.1} parent=0 // pred_check
    _
  $region7: #{mctf_loss.1} parent=0 // pred_check_branch
    %22 = sbr.rel (0) target = $region9
  $region8: #{mctf_loss.1} parent=0 // pred_region
    %s23 = sadd.s32 0, 0
    %s24 = smul.u32 2, %s23
    %p25 = scmp.lt.s32.totalorder %s24, 1
    %s26 = scalar_select %p25, %s24, 1
    %s27 = smul.addr %s26, 8
    %s28 = scalar_lea.vmem %s1, %s27
    %s29 = sadd.s32 0, 0
    %s30 = smul.u32 2, %s29
  $region9: #{mctf_loss.1} parent=0 // pred_fallthru
    _
  // Predicated region
  $region10: #{mctf_loss.1} parent=0 // pred_check
    _
  $region11: #{mctf_loss.1} parent=0 // pred_check_branch
    %32 = sbr.rel (0) target = $region13
  $region12: #{mctf_loss.1} parent=0 // pred_region
    %s33 = sadd.s32 0, 0
    %s34 = smul.u32 2, %s33
    %p35 = scmp.lt.s32.totalorder %s34, 1
    %s36 = scalar_select %p35, %s34, 1
    %s37 = smul.addr %s36, 8
    %s38 = scalar_lea.vmem %s2, %s37
    %s39 = sadd.s32 0, 0
    %s40 = smul.u32 2, %s39
  $region13: #{mctf_loss.1} parent=0 // pred_fallthru
    _
  // Predicated region
  $region14: #{mctf_loss.1} parent=0 // pred_check
    _
  $region15: #{mctf_loss.1} parent=0 // pred_check_branch
    %42 = sbr.rel (0) target = $region17
  $region16: #{mctf_loss.1} parent=0 // pred_region
    %s43 = sadd.s32 0, 0
    %s44 = smul.u32 2, %s43
    %p45 = scmp.lt.s32.totalorder %s44, 1
    %s46 = scalar_select %p45, %s44, 1
    %s47 = smul.addr %s46, 8
    %s48 = scalar_lea.vmem %s3, %s47
    %s49 = sadd.s32 0, 0
    %s50 = smul.u32 2, %s49
  $region17: #{mctf_loss.1} parent=0 // pred_fallthru
    _
  // Predicated region
  $region18: #{mctf_loss.1} parent=0 // pred_check
    _
  $region19: #{mctf_loss.1} parent=0 // pred_check_branch
    %52 = sbr.rel (0) target = $region21
  $region20: #{mctf_loss.1} parent=0 // pred_region
    %s53 = sadd.s32 0, 0
    %s54 = smul.u32 2, %s53
    %p55 = scmp.lt.s32.totalorder %s54, 1
    %s56 = scalar_select %p55, %s54, 1
    %s57 = smul.addr %s56, 8
    %s58 = scalar_lea.vmem %s4, %s57
    %s59 = sadd.s32 0, 0
    %s60 = smul.u32 2, %s59
  $region21: #{mctf_loss.1} parent=0 // pred_fallthru
    _
  // Predicated region
  $region22: #{mctf_loss.1} parent=0 // pred_check
    _
  $region23: #{mctf_loss.1} parent=0 // pred_check_branch
    %62 = sbr.rel (0) target = $region25
  $region24: #{mctf_loss.1} parent=0 // pred_region
    %s63 = sadd.s32 0, 0
    %s64 = smul.u32 2, %s63
    %p65 = scmp.lt.s32.totalorder %s64, 1
    %s66 = scalar_select %p65, %s64, 1
    %s67 = smul.addr %s66, 8
    %s68 = scalar_lea.vmem %s5, %s67
    %s69 = sadd.s32 0, 0
    %s70 = smul.u32 2, %s69
  $region25: #{mctf_loss.1} parent=0 // pred_fallthru
    _
  %s71 = sadd.s32 0, 0
  %s72 = smul.u32 2, %s71
  %p73 = scmp.lt.s32.totalorder %s72, 1
  %s74 = scalar_select %p73, %s72, 1
  %s75 = smul.addr %s74, 8
  %s76 = scalar_lea.vmem %s0, %s75
  %s77 = sadd.s32 0, 0
  %s78 = smul.u32 2, %s77
  %p79 = scmp.lt.s32.totalorder %s78, 1
  %s80 = scalar_select %p79, %s78, 1
  %s81 = smul.addr %s80, 8
  %s82 = scalar_lea.vmem %s1, %s81
  %s83 = sadd.s32 0, 0
  %s84 = smul.u32 2, %s83
  %p85 = scmp.lt.s32.totalorder %s84, 1
  %s86 = scalar_select %p85, %s84, 1
  %s87 = smul.addr %s86, 8
  %s88 = scalar_lea.vmem %s2, %s87
  %s89 = sadd.s32 0, 0
  %s90 = smul.u32 2, %s89
  %p91 = scmp.lt.s32.totalorder %s90, 1
  %s92 = scalar_select %p91, %s90, 1
  %s93 = smul.addr %s92, 8
  %s94 = scalar_lea.vmem %s3, %s93
  %s95 = sadd.s32 0, 0
  %s96 = smul.u32 2, %s95
  %p97 = scmp.lt.s32.totalorder %s96, 1
  %s98 = scalar_select %p97, %s96, 1
  %s99 = smul.addr %s98, 8
  %s100 = scalar_lea.vmem %s4, %s99
  %s101 = sadd.s32 0, 0
  %s102 = smul.u32 2, %s101
  %p103 = scmp.lt.s32.totalorder %s102, 1
  %s104 = scalar_select %p103, %s102, 1
  %s105 = smul.addr %s104, 8
  %s106 = scalar_lea.vmem %s5, %s105
  %s107 = sadd.s32 0, 0
  %s108 = smul.u32 2, %s107
  %p109 = scmp.lt.s32.totalorder %s108, 1
  %s110 = scalar_select %p109, %s108, 1
  %s111 = smul.addr %s110, 8
  %s112 = scalar_lea.vmem %s0, %s111
  %s113 = sadd.s32 0, 0
  %s114 = smul.u32 2, %s113
  %s115 = sadd.s32 0, 0
  %s116 = smul.u32 2, %s115
  %p117 = scmp.lt.s32.totalorder %s116, 1
  %s118 = scalar_select %p117, %s116, 1
  %s119 = smul.addr %s118, 8
  %s120 = scalar_lea.vmem %s1, %s119
  %s121 = sadd.s32 0, 0
  %s122 = smul.u32 2, %s121
  %s123 = sadd.s32 0, 0
  %s124 = smul.u32 2, %s123
  %p125 = scmp.lt.s32.totalorder %s124, 1
  %s126 = scalar_select %p125, %s124, 1
  %s127 = smul.addr %s126, 8
  %s128 = scalar_lea.vmem %s2, %s127
  %s129 = sadd.s32 0, 0
  %s130 = smul.u32 2, %s129
  %s131 = sadd.s32 0, 0
  %s132 = smul.u32 2, %s131
  %p133 = scmp.lt.s32.totalorder %s132, 1
  %s134 = scalar_select %p133, %s132, 1
  %s135 = smul.addr %s134, 8
  %s136 = scalar_lea.vmem %s3, %s135
  %s137 = sadd.s32 0, 0
  %s138 = smul.u32 2, %s137
  %s139 = sadd.s32 0, 0
  %s140 = smul.u32 2, %s139
  %p141 = scmp.lt.s32.totalorder %s140, 1
  %s142 = scalar_select %p141, %s140, 1
  %s143 = smul.addr %s142, 8
  %s144 = scalar_lea.vmem %s4, %s143
  %s145 = sadd.s32 0, 0
  %s146 = smul.u32 2, %s145
  %s147 = sadd.s32 0, 0
  %s148 = smul.u32 2, %s147
  %p149 = scmp.lt.s32.totalorder %s148, 1
  %s150 = scalar_select %p149, %s148, 1
  %s151 = smul.addr %s150, 8
  %s152 = scalar_lea.vmem %s5, %s151
  %s153 = sadd.s32 0, 0
  %s154 = smul.u32 2, %s153
  %p155 = scmp.eq.s32.totalorder 0, 0
  // Predicated region
  $region26: #{mctf_loss.1} parent=0 // pred_check
    %p156 = pneg %p155
  $region27: #{mctf_loss.1} parent=0 // pred_check_branch
    %158 = sbr.rel (%p156) target = $region29
  $region28: #{mctf_loss.1} parent=0 // pred_region
    %159 = vst [vmem:[#allocation2] sm:$0xff] 0.0
  $region29: #{mctf_loss.1} parent=0 // pred_fallthru
    _
  %v160 = vld [vmem:[#allocation2] sm:$0xff]
  %v161 = vld [vmem:[%s112] sm:$0xff]
  %v162 = vld [vmem:[%s112 + $0x8] sm:$0xff]
  %v163 = vld [vmem:[%s120] sm:$0xff]
  %v164 = vld [vmem:[%s120 + $0x8] sm:$0xff]
  %v165 = vsub.f32 %v161, %v163
  %v166 = vsub.f32 %v162, %v164
  %v167 = vand.u32 2147483647, %v165
  %v168 = vand.u32 2147483647, %v166
  %v169 = vmul.f32 %v167, 0.00048828125
  %v170 = vmul.f32 %v168, 0.00048828125
  %v171 = vld [vmem:[%s128] sm:$0xff]
  %v172 = vld [vmem:[%s128 + $0x8] sm:$0xff]
  %v173 = vld [vmem:[%s136] sm:$0xff]
  %v174 = vld [vmem:[%s136 + $0x8] sm:$0xff]
  %v175 = vsub.f32 %v171, %v173
  %v176 = vsub.f32 %v172, %v174
  %v177 = vand.u32 2147483647, %v175
  %v178 = vand.u32 2147483647, %v176
  %v179 = vmul.f32 %v177, 0.00048828125
  %v180 = vmul.f32 %v178, 0.00048828125
  %v181 = vadd.f32 %v169, %v179
  %v182 = vadd.f32 %v170, %v180
  %v183 = vld [vmem:[%s144] sm:$0xff]
  %v184 = vld [vmem:[%s144 + $0x8] sm:$0xff]
  %v185 = vld [vmem:[%s152] sm:$0xff]
  %v186 = vld [vmem:[%s152 + $0x8] sm:$0xff]
  %v187 = vsub.f32 %v183, %v185
  %v188 = vsub.f32 %v184, %v186
  %v189 = vand.u32 2147483647, %v187
  %v190 = vand.u32 2147483647, %v188
  %v191 = vmul.f32 %v189, 0.00024414063
  %v192 = vmul.f32 %v190, 0.00024414063
  %v193 = vadd.f32 %v181, %v191
  %v194 = vadd.f32 %v182, %v192
  %v195 = vadd.f32 %v193, %v194
  %v196 = vadd.f32 %v160, %v195
  %197 = vst [vmem:[#allocation2] sm:$0xff] %v196
  // Predicated region
  $region30: #{mctf_loss.1} parent=0 // pred_check
    %p198 = pneg %p155
  $region31: #{mctf_loss.1} parent=0 // pred_check_branch
    %200 = sbr.rel (%p198) target = $region33
  $region32: #{mctf_loss.1} parent=0 // pred_region
    %v201 = vld [vmem:[#allocation2] sm:$0xff]
    %202 = vst [vmem:[%s6] sm:$0xff] %v201
  $region33: #{mctf_loss.1} parent=0 // pred_fallthru
    _
  // Predicated region
  $region34: #{mctf_loss.1} parent=0 // pred_check
    _
  $region35: #{mctf_loss.1} parent=0 // pred_check_branch
    %204 = sbr.rel (0) target = $region37
  $region36: #{mctf_loss.1} parent=0 // pred_region
    _
  $region37: #{mctf_loss.1} parent=0 // pred_fallthru
    _
  // Predicated region
  $region38: #{mctf_loss.1} parent=0 // pred_check
    _
  $region39: #{mctf_loss.1} parent=0 // pred_check_branch
    %206 = sbr.rel (0) target = $region41
  $region40: #{mctf_loss.1} parent=0 // pred_region
    _
  $region41: #{mctf_loss.1} parent=0 // pred_fallthru
    _

</llo_original>
